<compile_context>
chip_gen: v5e
topology: v5e:2x2
jax: 0.10.0
libtpu: 0.0.40
codegen_flags: <defaults>
</compile_context>

<pallas_src>
import functools

import jax
import jax.numpy as jnp
from jax.experimental import pallas as pl
from jax.experimental.pallas import tpu as pltpu


# ----------------------------------------------------------------------------
# Pallas kernel: stacked LSTM cell (one time step, L layers)
# ----------------------------------------------------------------------------
def lstm_stack_kernel(emb_ref, tilde_ref, h0_ref, c0_ref,
                      w_emb_ref, w_tilde_ref, wih_ref, whh_ref, b_ref,
                      hout_ref, cout_ref):
    # emb_ref    : (B, I)        decoder-step embedding
    # tilde_ref  : (B, H)        previous attention output (zeros on first step)
    # h0_ref     : (L, B, H)     previous hidden states   (aliased -> hout_ref)
    # c0_ref     : (L, B, H)     previous cell states     (aliased -> cout_ref)
    # w_emb_ref  : (I, 4H)       layer-0 input->gates weight, emb rows   (pre-T)
    # w_tilde_ref: (H, 4H)       layer-0 input->gates weight, tilde rows (pre-T)
    # wih_ref    : (L-1, H, 4H)  layers 1..L-1 input->gates weights      (pre-T)
    # whh_ref    : (L, H, 4H)    hidden->gates weights                   (pre-T)
    # b_ref      : (L, 1, 4H)    folded bias (b_ih + b_hh)
    # hout_ref   : (L, B, H)     new hidden states
    # cout_ref   : (L, B, H)     new cell states
    L = h0_ref.shape[0]
    H = h0_ref.shape[2]

    # ---- Off the serial chain: gate terms that only depend on kernel inputs.
    #      L + 2 independent small dots -> they pipeline through the MXU
    #      instead of sitting on the layer->layer dependency chain.
    pre = []
    for l in range(L):                               # static, unrolled
        g = jnp.dot(h0_ref[l], whh_ref[l],
                    preferred_element_type=jnp.float32) + b_ref[l]
        if l == 0:
            g = g + jnp.dot(emb_ref[...], w_emb_ref[...],
                            preferred_element_type=jnp.float32)
            g = g + jnp.dot(tilde_ref[...], w_tilde_ref[...],
                            preferred_element_type=jnp.float32)
        pre.append(g)                                # (B, 4H)

    # ---- Serial chain: one input-projection dot + gate math per layer.
    h = None
    for l in range(L):                               # static, unrolled
        if l == 0:
            gates = pre[0]                           # fully precomputed
        else:
            gates = pre[l] + jnp.dot(h, wih_ref[l - 1],
                                     preferred_element_type=jnp.float32)

        # Full-tile nonlinearities on the lane-dense (B, 4H) gate tile, then
        # slice i/f/g/o (PyTorch gate order: input, forget, cell, output).
        sg = jax.nn.sigmoid(gates)                   # one EUP pass
        tg = jnp.tanh(gates)                         # one EUP pass
        i = sg[:, 0 * H:1 * H]
        f = sg[:, 1 * H:2 * H]
        gg = tg[:, 2 * H:3 * H]
        o = sg[:, 3 * H:4 * H]

        c = f * c0_ref[l] + i * gg
        h = o * jnp.tanh(c)

        hout_ref[l] = h
        cout_ref[l] = c
        # next-layer input is h (eval mode: inter-layer dropout = identity)


# ----------------------------------------------------------------------------
# Wrapper (glue: seq-dim squeeze, pallas_call plumbing, y = h_out[-1])
# ----------------------------------------------------------------------------
@functools.partial(jax.jit, donate_argnums=())
def decoder_forward(params, emb_t, h_t_1_tilde, h_t_1):
    """Mirrors Decoder.forward(emb_t, h_t_1_tilde, h_t_1).

    emb_t:        (B, 1, input_size)
    h_t_1_tilde:  (B, 1, hidden_size) or None
    h_t_1:        tuple (h0, c0), each (n_layers, B, hidden_size)
    returns:      y (B, 1, hidden_size), (h_out, c_out)
    """
    w_emb_t, w_tilde_t, wih_t, whh_t, b = params
    h0, c0 = h_t_1
    B = emb_t.shape[0]
    L, _, H = h0.shape

    emb = emb_t[:, 0, :]                             # (B, I)  seq_len == 1
    if h_t_1_tilde is None:
        # zero contribution from the tilde projection on the first step
        tilde = jnp.zeros((B, H), dtype=emb_t.dtype)
    else:
        tilde = h_t_1_tilde[:, 0, :]                 # (B, H)

    vmem = pl.BlockSpec(memory_space=pltpu.MemorySpace.VMEM)
    h_out, c_out = pl.pallas_call(
        lstm_stack_kernel,
        out_shape=(
            jax.ShapeDtypeStruct((L, B, H), jnp.float32),
            jax.ShapeDtypeStruct((L, B, H), jnp.float32),
        ),
        in_specs=[vmem] * 9,
        out_specs=(vmem, vmem),
        # update decoder state in place: h0 -> h_out, c0 -> c_out
        input_output_aliases={2: 0, 3: 1},
    )(emb, tilde, h0, c0, w_emb_t, w_tilde_t, wih_t, whh_t, b)

    y = h_out[L - 1][:, None, :]                     # top-layer hidden == output
    return y, (h_out, c_out)


# ----------------------------------------------------------------------------
# Pure-JAX reference (correctness check; consumes the same param layout)
# ----------------------------------------------------------------------------
def decoder_forward_ref(params, emb_t, h_t_1_tilde, h_t_1):
    w_emb_t, w_tilde_t, wih_t, whh_t, b = params
    h0, c0 = h_t_1
    B = emb_t.shape[0]
    L, _, H = h0.shape
    if h_t_1_tilde is None:
        h_t_1_tilde = jnp.zeros((B, 1, H), dtype=emb_t.dtype)
    x = jnp.concatenate([emb_t, h_t_1_tilde], axis=-1)[:, 0, :]
    wih0_t = jnp.concatenate([w_emb_t, w_tilde_t], axis=0)     # (I+H, 4H)
    h_new, c_new = [], []
    for l in range(L):
        wih = wih0_t if l == 0 else wih_t[l - 1]
        gates = x @ wih + h0[l] @ whh_t[l] + b[l]
        i = jax.nn.sigmoid(gates[:, 0 * H:1 * H])
        f = jax.nn.sigmoid(gates[:, 1 * H:2 * H])
        g = jnp.tanh(gates[:, 2 * H:3 * H])
        o = jax.nn.sigmoid(gates[:, 3 * H:4 * H])
        c = f * c0[l] + i * g
        h = o * jnp.tanh(c)
        h_new.append(h)
        c_new.append(c)
        x = h
    return x[:, None, :], (jnp.stack(h_new), jnp.stack(c_new))


# ----------------------------------------------------------------------------
# Deterministic parameter init (nn.LSTM shapes, uniform(+/- 1/sqrt(H))),
# stored pre-transposed / pre-split in the MXU-friendly (K, 4H) layout.
# ----------------------------------------------------------------------------
def init_decoder_params(key, input_size, hidden_size, n_layers):
    I, H, L = input_size, hidden_size, n_layers
    D = I + H                      # LSTM input_size = input_size + hidden_size
    bound = 1.0 / jnp.sqrt(jnp.float32(H))
    ks = jax.random.split(key, 6)
    uni = lambda k, shape: jax.random.uniform(k, shape, jnp.float32, -bound, bound)

    wih0 = uni(ks[0], (4 * H, D))              # layer 0: weight_ih_l0
    wihr = uni(ks[1], (L - 1, 4 * H, H))       # layers 1..L-1: weight_ih_l{1..}
    whh = uni(ks[2], (L, 4 * H, H))            # weight_hh per layer
    bih = uni(ks[3], (L, 1, 4 * H))
    bhh = uni(ks[4], (L, 1, 4 * H))

    # one-time transposes / splits (XLA ops outside the kernel)
    wih0_t = wih0.T                            # (D, 4H)
    w_emb_t = wih0_t[:I, :]                    # (I, 4H)  emb columns of layer 0
    w_tilde_t = wih0_t[I:, :]                  # (H, 4H)  tilde columns of layer 0
    wih_t = jnp.transpose(wihr, (0, 2, 1))     # (L-1, H, 4H)
    whh_t = jnp.transpose(whh, (0, 2, 1))      # (L, H, 4H)
    b = bih + bhh                              # fold the two biases
    return (w_emb_t, w_tilde_t, wih_t, whh_t, b)


if __name__ == "__main__":
    B, INPUT_SIZE, HIDDEN_SIZE, N_LAYERS = 2, 32, 32, 4

    key = jax.random.PRNGKey(0)
    k_par, k_emb, k_tilde, k_h, k_c = jax.random.split(key, 5)

    params = init_decoder_params(k_par, INPUT_SIZE, HIDDEN_SIZE, N_LAYERS)

    emb_t = jax.random.normal(k_emb, (B, 1, INPUT_SIZE), jnp.float32)
    h_t_1_tilde = jax.random.normal(k_tilde, (B, 1, HIDDEN_SIZE), jnp.float32)
    h0 = jax.random.normal(k_h, (N_LAYERS, B, HIDDEN_SIZE), jnp.float32)
    c0 = jax.random.normal(k_c, (N_LAYERS, B, HIDDEN_SIZE), jnp.float32)

    # Pure-JAX references (computed first, independent of the aliasing hint)
    y_ref, (h_ref, c_ref) = decoder_forward_ref(params, emb_t, h_t_1_tilde, (h0, c0))
    y_ref0, (h_ref0, c_ref0) = decoder_forward_ref(params, emb_t, None, (h0, c0))
    jax.block_until_ready((y_ref, h_ref, c_ref, y_ref0, h_ref0, c_ref0))

    # Pallas kernel (regular step)
    y, (h_out, c_out) = decoder_forward(params, emb_t, h_t_1_tilde, (h0, c0))
    jax.block_until_ready((y, h_out, c_out))

    # Pallas kernel (first step: h_t_1_tilde is None)
    y0, (h_out0, c_out0) = decoder_forward(params, emb_t, None, (h0, c0))
    jax.block_until_ready((y0, h_out0, c_out0))

    # Correctness checks
    assert jnp.allclose(y, y_ref, atol=1e-5, rtol=1e-5)
    assert jnp.allclose(h_out, h_ref, atol=1e-5, rtol=1e-5)
    assert jnp.allclose(c_out, c_ref, atol=1e-5, rtol=1e-5)
    assert jnp.allclose(y0, y_ref0, atol=1e-5, rtol=1e-5)
    assert jnp.allclose(h_out0, h_ref0, atol=1e-5, rtol=1e-5)
    assert jnp.allclose(c_out0, c_ref0, atol=1e-5, rtol=1e-5)

    print("KERNEL_OK")
</pallas_src>

<mosaic_0001>
module attributes {stable_mosaic.version = 11 : i64} {
  func.func @lstm_stack_kernel(%arg0: memref<2x32xf32, #tpu.memory_space<vmem>>, %arg1: memref<2x32xf32, #tpu.memory_space<vmem>>, %arg2: memref<4x2x32xf32, #tpu.memory_space<vmem>>, %arg3: memref<4x2x32xf32, #tpu.memory_space<vmem>>, %arg4: memref<32x128xf32, #tpu.memory_space<vmem>>, %arg5: memref<32x128xf32, #tpu.memory_space<vmem>>, %arg6: memref<3x32x128xf32, #tpu.memory_space<vmem>>, %arg7: memref<4x32x128xf32, #tpu.memory_space<vmem>>, %arg8: memref<4x1x128xf32, #tpu.memory_space<vmem>>, %arg9: memref<4x2x32xf32, #tpu.memory_space<vmem>>, %arg10: memref<4x2x32xf32, #tpu.memory_space<vmem>>) attributes {dimension_semantics = [], scalar_prefetch = 0 : i64, scratch_operands = 0 : i64, tpu.core_type = #tpu.core_type<tc>} {
    %c0 = arith.constant 0 : index
    %c0_0 = arith.constant 0 : index
    %c0_1 = arith.constant 0 : index
    %0 = vector.load %arg2[%c0, %c0_0, %c0_1] : memref<4x2x32xf32, #tpu.memory_space<vmem>>, vector<1x2x32xf32>
    %1 = vector.shape_cast %0 : vector<1x2x32xf32> to vector<2x32xf32>
    %c0_2 = arith.constant 0 : index
    %c0_3 = arith.constant 0 : index
    %c0_4 = arith.constant 0 : index
    %2 = vector.load %arg7[%c0_2, %c0_3, %c0_4] : memref<4x32x128xf32, #tpu.memory_space<vmem>>, vector<1x32x128xf32>
    %3 = vector.shape_cast %2 : vector<1x32x128xf32> to vector<32x128xf32>
    %cst = arith.constant dense<0.000000e+00> : vector<2x128xf32>
    %4 = tpu.matmul %1, %3, %cst {dimension_numbers = #tpu.dot_dimension_numbers<[1], [0], [0], [1], [0, 0, 1, 1], [], []>} : vector<2x32xf32>, vector<32x128xf32>, vector<2x128xf32> -> vector<2x128xf32>
    %c0_5 = arith.constant 0 : index
    %c0_6 = arith.constant 0 : index
    %c0_7 = arith.constant 0 : index
    %5 = vector.load %arg8[%c0_5, %c0_6, %c0_7] : memref<4x1x128xf32, #tpu.memory_space<vmem>>, vector<1x1x128xf32>
    %6 = vector.shape_cast %5 : vector<1x1x128xf32> to vector<1x128xf32>
    %7 = vector.broadcast %6 : vector<1x128xf32> to vector<2x128xf32>
    %8 = arith.addf %4, %7 : vector<2x128xf32>
    %c0_8 = arith.constant 0 : index
    %c0_9 = arith.constant 0 : index
    %9 = vector.load %arg0[%c0_8, %c0_9] : memref<2x32xf32, #tpu.memory_space<vmem>>, vector<2x32xf32>
    %c0_10 = arith.constant 0 : index
    %c0_11 = arith.constant 0 : index
    %10 = vector.load %arg4[%c0_10, %c0_11] : memref<32x128xf32, #tpu.memory_space<vmem>>, vector<32x128xf32>
    %cst_12 = arith.constant dense<0.000000e+00> : vector<2x128xf32>
    %11 = tpu.matmul %9, %10, %cst_12 {dimension_numbers = #tpu.dot_dimension_numbers<[1], [0], [0], [1], [0, 0, 1, 1], [], []>} : vector<2x32xf32>, vector<32x128xf32>, vector<2x128xf32> -> vector<2x128xf32>
    %12 = arith.addf %8, %11 : vector<2x128xf32>
    %c0_13 = arith.constant 0 : index
    %c0_14 = arith.constant 0 : index
    %13 = vector.load %arg1[%c0_13, %c0_14] : memref<2x32xf32, #tpu.memory_space<vmem>>, vector<2x32xf32>
    %c0_15 = arith.constant 0 : index
    %c0_16 = arith.constant 0 : index
    %14 = vector.load %arg5[%c0_15, %c0_16] : memref<32x128xf32, #tpu.memory_space<vmem>>, vector<32x128xf32>
    %cst_17 = arith.constant dense<0.000000e+00> : vector<2x128xf32>
    %15 = tpu.matmul %13, %14, %cst_17 {dimension_numbers = #tpu.dot_dimension_numbers<[1], [0], [0], [1], [0, 0, 1, 1], [], []>} : vector<2x32xf32>, vector<32x128xf32>, vector<2x128xf32> -> vector<2x128xf32>
    %16 = arith.addf %12, %15 : vector<2x128xf32>
    %c1 = arith.constant 1 : index
    %c0_18 = arith.constant 0 : index
    %c0_19 = arith.constant 0 : index
    %17 = vector.load %arg2[%c1, %c0_18, %c0_19] : memref<4x2x32xf32, #tpu.memory_space<vmem>>, vector<1x2x32xf32>
    %18 = vector.shape_cast %17 : vector<1x2x32xf32> to vector<2x32xf32>
    %c1_20 = arith.constant 1 : index
    %c0_21 = arith.constant 0 : index
    %c0_22 = arith.constant 0 : index
    %19 = vector.load %arg7[%c1_20, %c0_21, %c0_22] : memref<4x32x128xf32, #tpu.memory_space<vmem>>, vector<1x32x128xf32>
    %20 = vector.shape_cast %19 : vector<1x32x128xf32> to vector<32x128xf32>
    %cst_23 = arith.constant dense<0.000000e+00> : vector<2x128xf32>
    %21 = tpu.matmul %18, %20, %cst_23 {dimension_numbers = #tpu.dot_dimension_numbers<[1], [0], [0], [1], [0, 0, 1, 1], [], []>} : vector<2x32xf32>, vector<32x128xf32>, vector<2x128xf32> -> vector<2x128xf32>
    %c1_24 = arith.constant 1 : index
    %c0_25 = arith.constant 0 : index
    %c0_26 = arith.constant 0 : index
    %22 = vector.load %arg8[%c1_24, %c0_25, %c0_26] : memref<4x1x128xf32, #tpu.memory_space<vmem>>, vector<1x1x128xf32>
    %23 = vector.shape_cast %22 : vector<1x1x128xf32> to vector<1x128xf32>
    %24 = vector.broadcast %23 : vector<1x128xf32> to vector<2x128xf32>
    %25 = arith.addf %21, %24 : vector<2x128xf32>
    %c2 = arith.constant 2 : index
    %c0_27 = arith.constant 0 : index
    %c0_28 = arith.constant 0 : index
    %26 = vector.load %arg2[%c2, %c0_27, %c0_28] : memref<4x2x32xf32, #tpu.memory_space<vmem>>, vector<1x2x32xf32>
    %27 = vector.shape_cast %26 : vector<1x2x32xf32> to vector<2x32xf32>
    %c2_29 = arith.constant 2 : index
    %c0_30 = arith.constant 0 : index
    %c0_31 = arith.constant 0 : index
    %28 = vector.load %arg7[%c2_29, %c0_30, %c0_31] : memref<4x32x128xf32, #tpu.memory_space<vmem>>, vector<1x32x128xf32>
    %29 = vector.shape_cast %28 : vector<1x32x128xf32> to vector<32x128xf32>
    %cst_32 = arith.constant dense<0.000000e+00> : vector<2x128xf32>
    %30 = tpu.matmul %27, %29, %cst_32 {dimension_numbers = #tpu.dot_dimension_numbers<[1], [0], [0], [1], [0, 0, 1, 1], [], []>} : vector<2x32xf32>, vector<32x128xf32>, vector<2x128xf32> -> vector<2x128xf32>
    %c2_33 = arith.constant 2 : index
    %c0_34 = arith.constant 0 : index
    %c0_35 = arith.constant 0 : index
    %31 = vector.load %arg8[%c2_33, %c0_34, %c0_35] : memref<4x1x128xf32, #tpu.memory_space<vmem>>, vector<1x1x128xf32>
    %32 = vector.shape_cast %31 : vector<1x1x128xf32> to vector<1x128xf32>
    %33 = vector.broadcast %32 : vector<1x128xf32> to vector<2x128xf32>
    %34 = arith.addf %30, %33 : vector<2x128xf32>
    %c3 = arith.constant 3 : index
    %c0_36 = arith.constant 0 : index
    %c0_37 = arith.constant 0 : index
    %35 = vector.load %arg2[%c3, %c0_36, %c0_37] : memref<4x2x32xf32, #tpu.memory_space<vmem>>, vector<1x2x32xf32>
    %36 = vector.shape_cast %35 : vector<1x2x32xf32> to vector<2x32xf32>
    %c3_38 = arith.constant 3 : index
    %c0_39 = arith.constant 0 : index
    %c0_40 = arith.constant 0 : index
    %37 = vector.load %arg7[%c3_38, %c0_39, %c0_40] : memref<4x32x128xf32, #tpu.memory_space<vmem>>, vector<1x32x128xf32>
    %38 = vector.shape_cast %37 : vector<1x32x128xf32> to vector<32x128xf32>
    %cst_41 = arith.constant dense<0.000000e+00> : vector<2x128xf32>
    %39 = tpu.matmul %36, %38, %cst_41 {dimension_numbers = #tpu.dot_dimension_numbers<[1], [0], [0], [1], [0, 0, 1, 1], [], []>} : vector<2x32xf32>, vector<32x128xf32>, vector<2x128xf32> -> vector<2x128xf32>
    %c3_42 = arith.constant 3 : index
    %c0_43 = arith.constant 0 : index
    %c0_44 = arith.constant 0 : index
    %40 = vector.load %arg8[%c3_42, %c0_43, %c0_44] : memref<4x1x128xf32, #tpu.memory_space<vmem>>, vector<1x1x128xf32>
    %41 = vector.shape_cast %40 : vector<1x1x128xf32> to vector<1x128xf32>
    %42 = vector.broadcast %41 : vector<1x128xf32> to vector<2x128xf32>
    %43 = arith.addf %39, %42 : vector<2x128xf32>
    %44 = arith.negf %16 : vector<2x128xf32>
    %45 = math.exp %44 : vector<2x128xf32>
    %cst_45 = arith.constant 1.000000e+00 : f32
    %46 = vector.broadcast %cst_45 : f32 to vector<2x128xf32>
    %47 = arith.addf %46, %45 : vector<2x128xf32>
    %48 = arith.divf %46, %47 : vector<2x128xf32>
    %49 = math.tanh %16 : vector<2x128xf32>
    %50 = vector.extract_strided_slice %48 {offsets = [0, 0], sizes = [2, 32], strides = [1, 1]} : vector<2x128xf32> to vector<2x32xf32>
    %51 = vector.extract_strided_slice %48 {offsets = [0, 32], sizes = [2, 32], strides = [1, 1]} : vector<2x128xf32> to vector<2x32xf32>
    %52 = vector.extract_strided_slice %49 {offsets = [0, 64], sizes = [2, 32], strides = [1, 1]} : vector<2x128xf32> to vector<2x32xf32>
    %53 = vector.extract_strided_slice %48 {offsets = [0, 96], sizes = [2, 32], strides = [1, 1]} : vector<2x128xf32> to vector<2x32xf32>
    %c0_46 = arith.constant 0 : index
    %c0_47 = arith.constant 0 : index
    %c0_48 = arith.constant 0 : index
    %54 = vector.load %arg3[%c0_46, %c0_47, %c0_48] : memref<4x2x32xf32, #tpu.memory_space<vmem>>, vector<1x2x32xf32>
    %55 = vector.shape_cast %54 : vector<1x2x32xf32> to vector<2x32xf32>
    %56 = arith.mulf %51, %55 : vector<2x32xf32>
    %57 = arith.mulf %50, %52 : vector<2x32xf32>
    %58 = arith.addf %56, %57 : vector<2x32xf32>
    %59 = math.tanh %58 : vector<2x32xf32>
    %60 = arith.mulf %53, %59 : vector<2x32xf32>
    %c0_49 = arith.constant 0 : index
    %c0_50 = arith.constant 0 : index
    %c0_51 = arith.constant 0 : index
    %61 = vector.load %arg9[%c0_49, %c0_50, %c0_51] : memref<4x2x32xf32, #tpu.memory_space<vmem>>, vector<1x2x32xf32>
    %62 = vector.shape_cast %61 : vector<1x2x32xf32> to vector<2x32xf32>
    %63 = vector.shape_cast %60 : vector<2x32xf32> to vector<1x2x32xf32>
    tpu.vector_store %arg9[%c0_49, %c0_50, %c0_51], %63 {strides = array<i32>} : memref<4x2x32xf32, #tpu.memory_space<vmem>>, vector<1x2x32xf32>,
    %c0_52 = arith.constant 0 : index
    %c0_53 = arith.constant 0 : index
    %c0_54 = arith.constant 0 : index
    %64 = vector.load %arg10[%c0_52, %c0_53, %c0_54] : memref<4x2x32xf32, #tpu.memory_space<vmem>>, vector<1x2x32xf32>
    %65 = vector.shape_cast %64 : vector<1x2x32xf32> to vector<2x32xf32>
    %66 = vector.shape_cast %58 : vector<2x32xf32> to vector<1x2x32xf32>
    tpu.vector_store %arg10[%c0_52, %c0_53, %c0_54], %66 {strides = array<i32>} : memref<4x2x32xf32, #tpu.memory_space<vmem>>, vector<1x2x32xf32>,
    %c0_55 = arith.constant 0 : index
    %c0_56 = arith.constant 0 : index
    %c0_57 = arith.constant 0 : index
    %67 = vector.load %arg6[%c0_55, %c0_56, %c0_57] : memref<3x32x128xf32, #tpu.memory_space<vmem>>, vector<1x32x128xf32>
    %68 = vector.shape_cast %67 : vector<1x32x128xf32> to vector<32x128xf32>
    %cst_58 = arith.constant dense<0.000000e+00> : vector<2x128xf32>
    %69 = tpu.matmul %60, %68, %cst_58 {dimension_numbers = #tpu.dot_dimension_numbers<[1], [0], [0], [1], [0, 0, 1, 1], [], []>} : vector<2x32xf32>, vector<32x128xf32>, vector<2x128xf32> -> vector<2x128xf32>
    %70 = arith.addf %25, %69 : vector<2x128xf32>
    %71 = arith.negf %70 : vector<2x128xf32>
    %72 = math.exp %71 : vector<2x128xf32>
    %cst_59 = arith.constant 1.000000e+00 : f32
    %73 = vector.broadcast %cst_59 : f32 to vector<2x128xf32>
    %74 = arith.addf %73, %72 : vector<2x128xf32>
    %75 = arith.divf %73, %74 : vector<2x128xf32>
    %76 = math.tanh %70 : vector<2x128xf32>
    %77 = vector.extract_strided_slice %75 {offsets = [0, 0], sizes = [2, 32], strides = [1, 1]} : vector<2x128xf32> to vector<2x32xf32>
    %78 = vector.extract_strided_slice %75 {offsets = [0, 32], sizes = [2, 32], strides = [1, 1]} : vector<2x128xf32> to vector<2x32xf32>
    %79 = vector.extract_strided_slice %76 {offsets = [0, 64], sizes = [2, 32], strides = [1, 1]} : vector<2x128xf32> to vector<2x32xf32>
    %80 = vector.extract_strided_slice %75 {offsets = [0, 96], sizes = [2, 32], strides = [1, 1]} : vector<2x128xf32> to vector<2x32xf32>
    %c1_60 = arith.constant 1 : index
    %c0_61 = arith.constant 0 : index
    %c0_62 = arith.constant 0 : index
    %81 = vector.load %arg3[%c1_60, %c0_61, %c0_62] : memref<4x2x32xf32, #tpu.memory_space<vmem>>, vector<1x2x32xf32>
    %82 = vector.shape_cast %81 : vector<1x2x32xf32> to vector<2x32xf32>
    %83 = arith.mulf %78, %82 : vector<2x32xf32>
    %84 = arith.mulf %77, %79 : vector<2x32xf32>
    %85 = arith.addf %83, %84 : vector<2x32xf32>
    %86 = math.tanh %85 : vector<2x32xf32>
    %87 = arith.mulf %80, %86 : vector<2x32xf32>
    %c1_63 = arith.constant 1 : index
    %c0_64 = arith.constant 0 : index
    %c0_65 = arith.constant 0 : index
    %88 = vector.load %arg9[%c1_63, %c0_64, %c0_65] : memref<4x2x32xf32, #tpu.memory_space<vmem>>, vector<1x2x32xf32>
    %89 = vector.shape_cast %88 : vector<1x2x32xf32> to vector<2x32xf32>
    %90 = vector.shape_cast %87 : vector<2x32xf32> to vector<1x2x32xf32>
    tpu.vector_store %arg9[%c1_63, %c0_64, %c0_65], %90 {strides = array<i32>} : memref<4x2x32xf32, #tpu.memory_space<vmem>>, vector<1x2x32xf32>,
    %c1_66 = arith.constant 1 : index
    %c0_67 = arith.constant 0 : index
    %c0_68 = arith.constant 0 : index
    %91 = vector.load %arg10[%c1_66, %c0_67, %c0_68] : memref<4x2x32xf32, #tpu.memory_space<vmem>>, vector<1x2x32xf32>
    %92 = vector.shape_cast %91 : vector<1x2x32xf32> to vector<2x32xf32>
    %93 = vector.shape_cast %85 : vector<2x32xf32> to vector<1x2x32xf32>
    tpu.vector_store %arg10[%c1_66, %c0_67, %c0_68], %93 {strides = array<i32>} : memref<4x2x32xf32, #tpu.memory_space<vmem>>, vector<1x2x32xf32>,
    %c1_69 = arith.constant 1 : index
    %c0_70 = arith.constant 0 : index
    %c0_71 = arith.constant 0 : index
    %94 = vector.load %arg6[%c1_69, %c0_70, %c0_71] : memref<3x32x128xf32, #tpu.memory_space<vmem>>, vector<1x32x128xf32>
    %95 = vector.shape_cast %94 : vector<1x32x128xf32> to vector<32x128xf32>
    %cst_72 = arith.constant dense<0.000000e+00> : vector<2x128xf32>
    %96 = tpu.matmul %87, %95, %cst_72 {dimension_numbers = #tpu.dot_dimension_numbers<[1], [0], [0], [1], [0, 0, 1, 1], [], []>} : vector<2x32xf32>, vector<32x128xf32>, vector<2x128xf32> -> vector<2x128xf32>
    %97 = arith.addf %34, %96 : vector<2x128xf32>
    %98 = arith.negf %97 : vector<2x128xf32>
    %99 = math.exp %98 : vector<2x128xf32>
    %cst_73 = arith.constant 1.000000e+00 : f32
    %100 = vector.broadcast %cst_73 : f32 to vector<2x128xf32>
    %101 = arith.addf %100, %99 : vector<2x128xf32>
    %102 = arith.divf %100, %101 : vector<2x128xf32>
    %103 = math.tanh %97 : vector<2x128xf32>
    %104 = vector.extract_strided_slice %102 {offsets = [0, 0], sizes = [2, 32], strides = [1, 1]} : vector<2x128xf32> to vector<2x32xf32>
    %105 = vector.extract_strided_slice %102 {offsets = [0, 32], sizes = [2, 32], strides = [1, 1]} : vector<2x128xf32> to vector<2x32xf32>
    %106 = vector.extract_strided_slice %103 {offsets = [0, 64], sizes = [2, 32], strides = [1, 1]} : vector<2x128xf32> to vector<2x32xf32>
    %107 = vector.extract_strided_slice %102 {offsets = [0, 96], sizes = [2, 32], strides = [1, 1]} : vector<2x128xf32> to vector<2x32xf32>
    %c2_74 = arith.constant 2 : index
    %c0_75 = arith.constant 0 : index
    %c0_76 = arith.constant 0 : index
    %108 = vector.load %arg3[%c2_74, %c0_75, %c0_76] : memref<4x2x32xf32, #tpu.memory_space<vmem>>, vector<1x2x32xf32>
    %109 = vector.shape_cast %108 : vector<1x2x32xf32> to vector<2x32xf32>
    %110 = arith.mulf %105, %109 : vector<2x32xf32>
    %111 = arith.mulf %104, %106 : vector<2x32xf32>
    %112 = arith.addf %110, %111 : vector<2x32xf32>
    %113 = math.tanh %112 : vector<2x32xf32>
    %114 = arith.mulf %107, %113 : vector<2x32xf32>
    %c2_77 = arith.constant 2 : index
    %c0_78 = arith.constant 0 : index
    %c0_79 = arith.constant 0 : index
    %115 = vector.load %arg9[%c2_77, %c0_78, %c0_79] : memref<4x2x32xf32, #tpu.memory_space<vmem>>, vector<1x2x32xf32>
    %116 = vector.shape_cast %115 : vector<1x2x32xf32> to vector<2x32xf32>
    %117 = vector.shape_cast %114 : vector<2x32xf32> to vector<1x2x32xf32>
    tpu.vector_store %arg9[%c2_77, %c0_78, %c0_79], %117 {strides = array<i32>} : memref<4x2x32xf32, #tpu.memory_space<vmem>>, vector<1x2x32xf32>,
    %c2_80 = arith.constant 2 : index
    %c0_81 = arith.constant 0 : index
    %c0_82 = arith.constant 0 : index
    %118 = vector.load %arg10[%c2_80, %c0_81, %c0_82] : memref<4x2x32xf32, #tpu.memory_space<vmem>>, vector<1x2x32xf32>
    %119 = vector.shape_cast %118 : vector<1x2x32xf32> to vector<2x32xf32>
    %120 = vector.shape_cast %112 : vector<2x32xf32> to vector<1x2x32xf32>
    tpu.vector_store %arg10[%c2_80, %c0_81, %c0_82], %120 {strides = array<i32>} : memref<4x2x32xf32, #tpu.memory_space<vmem>>, vector<1x2x32xf32>,
    %c2_83 = arith.constant 2 : index
    %c0_84 = arith.constant 0 : index
    %c0_85 = arith.constant 0 : index
    %121 = vector.load %arg6[%c2_83, %c0_84, %c0_85] : memref<3x32x128xf32, #tpu.memory_space<vmem>>, vector<1x32x128xf32>
    %122 = vector.shape_cast %121 : vector<1x32x128xf32> to vector<32x128xf32>
    %cst_86 = arith.constant dense<0.000000e+00> : vector<2x128xf32>
    %123 = tpu.matmul %114, %122, %cst_86 {dimension_numbers = #tpu.dot_dimension_numbers<[1], [0], [0], [1], [0, 0, 1, 1], [], []>} : vector<2x32xf32>, vector<32x128xf32>, vector<2x128xf32> -> vector<2x128xf32>
    %124 = arith.addf %43, %123 : vector<2x128xf32>
    %125 = arith.negf %124 : vector<2x128xf32>
    %126 = math.exp %125 : vector<2x128xf32>
    %cst_87 = arith.constant 1.000000e+00 : f32
    %127 = vector.broadcast %cst_87 : f32 to vector<2x128xf32>
    %128 = arith.addf %127, %126 : vector<2x128xf32>
    %129 = arith.divf %127, %128 : vector<2x128xf32>
    %130 = math.tanh %124 : vector<2x128xf32>
    %131 = vector.extract_strided_slice %129 {offsets = [0, 0], sizes = [2, 32], strides = [1, 1]} : vector<2x128xf32> to vector<2x32xf32>
    %132 = vector.extract_strided_slice %129 {offsets = [0, 32], sizes = [2, 32], strides = [1, 1]} : vector<2x128xf32> to vector<2x32xf32>
    %133 = vector.extract_strided_slice %130 {offsets = [0, 64], sizes = [2, 32], strides = [1, 1]} : vector<2x128xf32> to vector<2x32xf32>
    %134 = vector.extract_strided_slice %129 {offsets = [0, 96], sizes = [2, 32], strides = [1, 1]} : vector<2x128xf32> to vector<2x32xf32>
    %c3_88 = arith.constant 3 : index
    %c0_89 = arith.constant 0 : index
    %c0_90 = arith.constant 0 : index
    %135 = vector.load %arg3[%c3_88, %c0_89, %c0_90] : memref<4x2x32xf32, #tpu.memory_space<vmem>>, vector<1x2x32xf32>
    %136 = vector.shape_cast %135 : vector<1x2x32xf32> to vector<2x32xf32>
    %137 = arith.mulf %132, %136 : vector<2x32xf32>
    %138 = arith.mulf %131, %133 : vector<2x32xf32>
    %139 = arith.addf %137, %138 : vector<2x32xf32>
    %140 = math.tanh %139 : vector<2x32xf32>
    %141 = arith.mulf %134, %140 : vector<2x32xf32>
    %c3_91 = arith.constant 3 : index
    %c0_92 = arith.constant 0 : index
    %c0_93 = arith.constant 0 : index
    %142 = vector.load %arg9[%c3_91, %c0_92, %c0_93] : memref<4x2x32xf32, #tpu.memory_space<vmem>>, vector<1x2x32xf32>
    %143 = vector.shape_cast %142 : vector<1x2x32xf32> to vector<2x32xf32>
    %144 = vector.shape_cast %141 : vector<2x32xf32> to vector<1x2x32xf32>
    tpu.vector_store %arg9[%c3_91, %c0_92, %c0_93], %144 {strides = array<i32>} : memref<4x2x32xf32, #tpu.memory_space<vmem>>, vector<1x2x32xf32>,
    %c3_94 = arith.constant 3 : index
    %c0_95 = arith.constant 0 : index
    %c0_96 = arith.constant 0 : index
    %145 = vector.load %arg10[%c3_94, %c0_95, %c0_96] : memref<4x2x32xf32, #tpu.memory_space<vmem>>, vector<1x2x32xf32>
    %146 = vector.shape_cast %145 : vector<1x2x32xf32> to vector<2x32xf32>
    %147 = vector.shape_cast %139 : vector<2x32xf32> to vector<1x2x32xf32>
    tpu.vector_store %arg10[%c3_94, %c0_95, %c0_96], %147 {strides = array<i32>} : memref<4x2x32xf32, #tpu.memory_space<vmem>>, vector<1x2x32xf32>,
    return
  }
}

</mosaic_0001>

<llo_original>
// kernel: decoder_forward.1
$region0: #{decoder_forward.1}
  #allocation0 [shape = 'u32[]', space=smem, size = 0x4, offset = 0x4, fixed_abs, tag = 'smem constant byte address 0x4 - core index']
  #allocation1 [shape = 'u32[72,128]{1,0:T(1,128)}', space=vmem, size = 0x9000, scoped, tag = 'internal scratch']
  %s0 = inlined_call_operand.vmem [shape: f32[2,32], index: 0, kind: input, shape index: {}]
  %s1 = inlined_call_operand.vmem [shape: f32[2,32], index: 1, kind: input, shape index: {}]
  %s2 = inlined_call_operand.vmem [shape: f32[4,2,32], index: 2, kind: input, shape index: {}, may-alias: {2,9}]
  %s3 = inlined_call_operand.vmem [shape: f32[4,2,32], index: 3, kind: input, shape index: {}, may-alias: {3,10}]
  %s4 = inlined_call_operand.hbm [shape: f32[32,128], index: 4, kind: input, shape index: {}]
  %s5 = inlined_call_operand.hbm [shape: f32[32,128], index: 5, kind: input, shape index: {}]
  %s6 = inlined_call_operand.hbm [shape: f32[3,32,128], index: 6, kind: input, shape index: {}]
  %s7 = inlined_call_operand.hbm [shape: f32[4,32,128], index: 7, kind: input, shape index: {}]
  %s8 = inlined_call_operand.vmem [shape: f32[4,1,128], index: 8, kind: input, shape index: {}]
  %s9 = inlined_call_operand.vmem [shape: f32[4,2,32], index: 9, kind: output, shape index: {0}, may-alias: {2,9}]
  %s10 = inlined_call_operand.vmem [shape: f32[4,2,32], index: 10, kind: output, shape index: {1}, may-alias: {3,10}]
  %11 = xla_tuple %s9, %s10
  %s12 = sld [smem:[#allocation0]]
  $region70: #{decoder_forward.1} parent=0
    _
  %s14 = ssub.s32 1, %s12
  %s15 = scalar_select 0, %s14, %s12
  $region1: #{decoder_forward.1} parent=0
    #allocation2 [shape = 'u8[16384]{0}', space=vmem, size = 0x4000, scoped, tag = 'input window, operand 4, single buffered']
    #allocation3 [shape = 's32[1]{0}', space=sflag, size = 0x4, scoped, tag = 'scoped memory for decoder_forward.1']
    #allocation4 [shape = 'u8[16384]{0}', space=vmem, size = 0x4000, scoped, tag = 'input window, operand 5, single buffered']
    #allocation5 [shape = 's32[1]{0}', space=sflag, size = 0x4, scoped, tag = 'scoped memory for decoder_forward.1']
    #allocation6 [shape = 'u8[49152]{0}', space=vmem, size = 0xc000, scoped, tag = 'input window, operand 6, single buffered']
    #allocation7 [shape = 'u8[65536]{0}', space=vmem, size = 0x10000, scoped, tag = 'input window, operand 7, single buffered']
    #allocation8 [shape = 's32[1]{0}', space=sflag, size = 0x4, scoped, tag = 'scoped memory for decoder_forward.1']
    %16 = vsyncpa [#allocation3], 0
    %17 = vsyncpa [#allocation5], 0
    %18 = vsyncpa [#allocation8], 0
    // Predicated region
    $region2: #{decoder_forward.1} parent=1 // pred_check
      _
    $region3: #{decoder_forward.1} parent=1 // pred_check_branch
      %20 = sbr.rel (0) target = $region5
    $region4: #{decoder_forward.1} parent=1 // pred_region
      _
    $region5: #{decoder_forward.1} parent=1 // pred_fallthru
      _
    // Predicated region
    $region6: #{decoder_forward.1} parent=1 // pred_check
      _
    $region7: #{decoder_forward.1} parent=1 // pred_check_branch
      %22 = sbr.rel (0) target = $region9
    $region8: #{decoder_forward.1} parent=1 // pred_region
      _
    $region9: #{decoder_forward.1} parent=1 // pred_fallthru
      _
    // Predicated region
    $region10: #{decoder_forward.1} parent=1 // pred_check
      _
    $region11: #{decoder_forward.1} parent=1 // pred_check_branch
      %24 = sbr.rel (0) target = $region13
    $region12: #{decoder_forward.1} parent=1 // pred_region
      _
    $region13: #{decoder_forward.1} parent=1 // pred_fallthru
      _
    // Predicated region
    $region14: #{decoder_forward.1} parent=1 // pred_check
      _
    $region15: #{decoder_forward.1} parent=1 // pred_check_branch
      %26 = sbr.rel (0) target = $region17
    $region16: #{decoder_forward.1} parent=1 // pred_region
      _
    $region17: #{decoder_forward.1} parent=1 // pred_fallthru
      _
    // Predicated region
    $region18: #{decoder_forward.1} parent=1 // pred_check
      _
    $region19: #{decoder_forward.1} parent=1 // pred_check_branch
      %28 = sbr.rel (0) target = $region21
    $region20: #{decoder_forward.1} parent=1 // pred_region
      %30 = vsyncadd [#allocation3], 0
      %s31 = sshll.u32 %s4, 4
      %s32 = int_to_ptr.hbm [resolvable:$true] %s31
      %s33 = sshll.u32 [#allocation2], 4
      %s34 = int_to_ptr.vmem [resolvable:$true] %s33
      %39 = dma.hbm_to_vmem [thread:$0]  %s32, 512, %s34, [#allocation3], 128, 128, 8
    $region21: #{decoder_forward.1} parent=1 // pred_fallthru
      _
    // Predicated region
    $region22: #{decoder_forward.1} parent=1 // pred_check
      _
    $region23: #{decoder_forward.1} parent=1 // pred_check_branch
      %41 = sbr.rel (0) target = $region25
    $region24: #{decoder_forward.1} parent=1 // pred_region
      %43 = vsyncadd [#allocation5], 0
      %s44 = sshll.u32 %s5, 4
      %s45 = int_to_ptr.hbm [resolvable:$true] %s44
      %s46 = sshll.u32 [#allocation4], 4
      %s47 = int_to_ptr.vmem [resolvable:$true] %s46
      %52 = dma.hbm_to_vmem [thread:$0]  %s45, 512, %s47, [#allocation5], 128, 128, 8
    $region25: #{decoder_forward.1} parent=1 // pred_fallthru
      _
    // Predicated region
    $region26: #{decoder_forward.1} parent=1 // pred_check
      _
    $region27: #{decoder_forward.1} parent=1 // pred_check_branch
      %54 = sbr.rel (0) target = $region29
    $region28: #{decoder_forward.1} parent=1 // pred_region
      %56 = vsyncadd [#allocation5], 0
      %s57 = sshll.u32 %s6, 4
      %s58 = int_to_ptr.hbm [resolvable:$true] %s57
      %s59 = sshll.u32 [#allocation6], 4
      %s60 = int_to_ptr.vmem [resolvable:$true] %s59
      %65 = dma.hbm_to_vmem [thread:$0]  %s58, 1536, %s60, [#allocation5], 128, 128, 8
    $region29: #{decoder_forward.1} parent=1 // pred_fallthru
      _
    // Predicated region
    $region30: #{decoder_forward.1} parent=1 // pred_check
      _
    $region31: #{decoder_forward.1} parent=1 // pred_check_branch
      %67 = sbr.rel (0) target = $region33
    $region32: #{decoder_forward.1} parent=1 // pred_region
      %69 = vsyncadd [#allocation8], 0
      %s70 = sshll.u32 %s7, 4
      %s71 = int_to_ptr.hbm [resolvable:$true] %s70
      %s72 = sshll.u32 [#allocation7], 4
      %s73 = int_to_ptr.vmem [resolvable:$true] %s72
      %78 = dma.hbm_to_vmem [thread:$0]  %s71, 2048, %s73, [#allocation8], 128, 128, 8
    $region33: #{decoder_forward.1} parent=1 // pred_fallthru
      _
    // Predicated region
    $region34: #{decoder_forward.1} parent=1 // pred_check
      _
    $region35: #{decoder_forward.1} parent=1 // pred_check_branch
      %80 = sbr.rel (0) target = $region37
    $region36: #{decoder_forward.1} parent=1 // pred_region
      _
    $region37: #{decoder_forward.1} parent=1 // pred_fallthru
      _
    // Predicated region
    $region38: #{decoder_forward.1} parent=1 // pred_check
      _
    $region39: #{decoder_forward.1} parent=1 // pred_check_branch
      %82 = sbr.rel (0) target = $region41
    $region40: #{decoder_forward.1} parent=1 // pred_region
      %84 = dma.done [#allocation3], 512
    $region41: #{decoder_forward.1} parent=1 // pred_fallthru
      _
    // Predicated region
    $region42: #{decoder_forward.1} parent=1 // pred_check
      _
    $region43: #{decoder_forward.1} parent=1 // pred_check_branch
      %86 = sbr.rel (0) target = $region45
    $region44: #{decoder_forward.1} parent=1 // pred_region
      %88 = dma.done [#allocation5], 512
    $region45: #{decoder_forward.1} parent=1 // pred_fallthru
      _
    // Predicated region
    $region46: #{decoder_forward.1} parent=1 // pred_check
      _
    $region47: #{decoder_forward.1} parent=1 // pred_check_branch
      %90 = sbr.rel (0) target = $region49
    $region48: #{decoder_forward.1} parent=1 // pred_region
      %92 = dma.done [#allocation5], 1536
    $region49: #{decoder_forward.1} parent=1 // pred_fallthru
      _
    // Predicated region
    $region50: #{decoder_forward.1} parent=1 // pred_check
      _
    $region51: #{decoder_forward.1} parent=1 // pred_check_branch
      %94 = sbr.rel (0) target = $region53
    $region52: #{decoder_forward.1} parent=1 // pred_region
      %96 = dma.done [#allocation8], 2048
    $region53: #{decoder_forward.1} parent=1 // pred_fallthru
      _
    %v97 = vld [vmem:[%s2] sm:$0x3]
    %v98 = vld [vmem:[#allocation7] sm:$0xff]
    %v99 = vld [vmem:[#allocation7 + $0x8] sm:$0xff]
    %v100 = vld [vmem:[#allocation7 + $0x10] sm:$0xff]
    %v101 = vld [vmem:[#allocation7 + $0x18] sm:$0xff]
    %v102 = vld [vmem:[%s8] sm:$0x1]
    %v104 = vperm.slane %v102, 0
    %vm106 = vcmask 261120
    %v108 = vsel %vm106, %v97, 0
    %110 = vmatpush.msra.mxu0 0.0
    %111 = vmatpush.msra.mxu0 0.0
    %112 = vmatpush.msra.mxu0 0.0
    %113 = vmatpush.msra.mxu0 0.0
    %114 = vmatpush.msra.mxu0 0.0
    %115 = vmatpush.msra.mxu0 0.0
    %116 = vmatpush.msra.mxu0 0.0
    %117 = vmatpush.msra.mxu0 0.0
    %118 = vmatpush.msra.mxu0 0.0
    %119 = vmatpush.msra.mxu0 0.0
    %120 = vmatpush.msra.mxu0 0.0
    %121 = vmatpush.msra.mxu0 0.0
    %122 = vmatpush.msra.mxu0 %v101
    %123 = vmatpush.msra.mxu0 %v100
    %124 = vmatpush.msra.mxu0 %v99
    %125 = vmatpush.msra.mxu0 %v98
    %126 = vmatmul.f32.gmra.mxu0 %v108
    %v127 = vpop.f32.mrf.mxu0
    %v128 = vadd.f32 %v104, %v127
    %129 = vdwg.mxu0
    %v130 = vld [vmem:[%s0] sm:$0x3]
    %v131 = vld [vmem:[#allocation2] sm:$0xff]
    %v132 = vld [vmem:[#allocation2 + $0x8] sm:$0xff]
    %v133 = vld [vmem:[#allocation2 + $0x10] sm:$0xff]
    %v134 = vld [vmem:[#allocation2 + $0x18] sm:$0xff]
    %v136 = vsel %vm106, %v130, 0
    %138 = vmatpush.msra.mxu0 0.0
    %139 = vmatpush.msra.mxu0 0.0
    %140 = vmatpush.msra.mxu0 0.0
    %141 = vmatpush.msra.mxu0 0.0
    %142 = vmatpush.msra.mxu0 0.0
    %143 = vmatpush.msra.mxu0 0.0
    %144 = vmatpush.msra.mxu0 0.0
    %145 = vmatpush.msra.mxu0 0.0
    %146 = vmatpush.msra.mxu0 0.0
    %147 = vmatpush.msra.mxu0 0.0
    %148 = vmatpush.msra.mxu0 0.0
    %149 = vmatpush.msra.mxu0 0.0
    %150 = vmatpush.msra.mxu0 %v134
    %151 = vmatpush.msra.mxu0 %v133
    %152 = vmatpush.msra.mxu0 %v132
    %153 = vmatpush.msra.mxu0 %v131
    %154 = vmatmul.f32.gmra.mxu0 %v136
    %v155 = vpop.f32.mrf.mxu0
    %v156 = vadd.f32 0.0, %v155
    %157 = vdwg.mxu0
    %v158 = vadd.f32 %v128, %v156
    %v159 = vld [vmem:[%s1] sm:$0x3]
    %v160 = vld [vmem:[#allocation4] sm:$0xff]
    %v161 = vld [vmem:[#allocation4 + $0x8] sm:$0xff]
    %v162 = vld [vmem:[#allocation4 + $0x10] sm:$0xff]
    %v163 = vld [vmem:[#allocation4 + $0x18] sm:$0xff]
    %v165 = vsel %vm106, %v159, 0
    %167 = vmatpush.msra.mxu0 0.0
    %168 = vmatpush.msra.mxu0 0.0
    %169 = vmatpush.msra.mxu0 0.0
    %170 = vmatpush.msra.mxu0 0.0
    %171 = vmatpush.msra.mxu0 0.0
    %172 = vmatpush.msra.mxu0 0.0
    %173 = vmatpush.msra.mxu0 0.0
    %174 = vmatpush.msra.mxu0 0.0
    %175 = vmatpush.msra.mxu0 0.0
    %176 = vmatpush.msra.mxu0 0.0
    %177 = vmatpush.msra.mxu0 0.0
    %178 = vmatpush.msra.mxu0 0.0
    %179 = vmatpush.msra.mxu0 %v163
    %180 = vmatpush.msra.mxu0 %v162
    %181 = vmatpush.msra.mxu0 %v161
    %182 = vmatpush.msra.mxu0 %v160
    %183 = vmatmul.f32.gmra.mxu0 %v165
    %v184 = vpop.f32.mrf.mxu0
    %v185 = vadd.f32 0.0, %v184
    %186 = vdwg.mxu0
    %v187 = vadd.f32 %v158, %v185
    %s188 = scalar_lea.vmem %s2, 2
    %v189 = vld [vmem:[%s188] sm:$0x3]
    %s190 = scalar_lea.vmem [#allocation7], 32
    %v191 = vld [vmem:[%s190] sm:$0xff]
    %v192 = vld [vmem:[%s190 + $0x8] sm:$0xff]
    %v193 = vld [vmem:[%s190 + $0x10] sm:$0xff]
    %v194 = vld [vmem:[%s190 + $0x18] sm:$0xff]
    %s195 = scalar_lea.vmem %s8, 1
    %v196 = vld [vmem:[%s195] sm:$0x1]
    %v198 = vperm.slane %v196, 0
    %v201 = vsel %vm106, %v189, 0
    %203 = vmatpush.msra.mxu0 0.0
    %204 = vmatpush.msra.mxu0 0.0
    %205 = vmatpush.msra.mxu0 0.0
    %206 = vmatpush.msra.mxu0 0.0
    %207 = vmatpush.msra.mxu0 0.0
    %208 = vmatpush.msra.mxu0 0.0
    %209 = vmatpush.msra.mxu0 0.0
    %210 = vmatpush.msra.mxu0 0.0
    %211 = vmatpush.msra.mxu0 0.0
    %212 = vmatpush.msra.mxu0 0.0
    %213 = vmatpush.msra.mxu0 0.0
    %214 = vmatpush.msra.mxu0 0.0
    %215 = vmatpush.msra.mxu0 %v194
    %216 = vmatpush.msra.mxu0 %v193
    %217 = vmatpush.msra.mxu0 %v192
    %218 = vmatpush.msra.mxu0 %v191
    %219 = vmatmul.f32.gmra.mxu0 %v201
    %v220 = vpop.f32.mrf.mxu0
    %v221 = vadd.f32 %v198, %v220
    %222 = vdwg.mxu0
    %s223 = scalar_lea.vmem %s2, 4
    %v224 = vld [vmem:[%s223] sm:$0x3]
    %s225 = scalar_lea.vmem [#allocation7], 64
    %v226 = vld [vmem:[%s225] sm:$0xff]
    %v227 = vld [vmem:[%s225 + $0x8] sm:$0xff]
    %v228 = vld [vmem:[%s225 + $0x10] sm:$0xff]
    %v229 = vld [vmem:[%s225 + $0x18] sm:$0xff]
    %s230 = scalar_lea.vmem %s8, 2
    %v231 = vld [vmem:[%s230] sm:$0x1]
    %v233 = vperm.slane %v231, 0
    %v236 = vsel %vm106, %v224, 0
    %238 = vmatpush.msra.mxu0 0.0
    %239 = vmatpush.msra.mxu0 0.0
    %240 = vmatpush.msra.mxu0 0.0
    %241 = vmatpush.msra.mxu0 0.0
    %242 = vmatpush.msra.mxu0 0.0
    %243 = vmatpush.msra.mxu0 0.0
    %244 = vmatpush.msra.mxu0 0.0
    %245 = vmatpush.msra.mxu0 0.0
    %246 = vmatpush.msra.mxu0 0.0
    %247 = vmatpush.msra.mxu0 0.0
    %248 = vmatpush.msra.mxu0 0.0
    %249 = vmatpush.msra.mxu0 0.0
    %250 = vmatpush.msra.mxu0 %v229
    %251 = vmatpush.msra.mxu0 %v228
    %252 = vmatpush.msra.mxu0 %v227
    %253 = vmatpush.msra.mxu0 %v226
    %254 = vmatmul.f32.gmra.mxu0 %v236
    %v255 = vpop.f32.mrf.mxu0
    %v256 = vadd.f32 %v233, %v255
    %257 = vdwg.mxu0
    %s258 = scalar_lea.vmem %s2, 6
    %v259 = vld [vmem:[%s258] sm:$0x3]
    %s260 = scalar_lea.vmem [#allocation7], 96
    %v261 = vld [vmem:[%s260] sm:$0xff]
    %v262 = vld [vmem:[%s260 + $0x8] sm:$0xff]
    %v263 = vld [vmem:[%s260 + $0x10] sm:$0xff]
    %v264 = vld [vmem:[%s260 + $0x18] sm:$0xff]
    %s265 = scalar_lea.vmem %s8, 3
    %v266 = vld [vmem:[%s265] sm:$0x1]
    %v268 = vperm.slane %v266, 0
    %v271 = vsel %vm106, %v259, 0
    %273 = vmatpush.msra.mxu0 0.0
    %274 = vmatpush.msra.mxu0 0.0
    %275 = vmatpush.msra.mxu0 0.0
    %276 = vmatpush.msra.mxu0 0.0
    %277 = vmatpush.msra.mxu0 0.0
    %278 = vmatpush.msra.mxu0 0.0
    %279 = vmatpush.msra.mxu0 0.0
    %280 = vmatpush.msra.mxu0 0.0
    %281 = vmatpush.msra.mxu0 0.0
    %282 = vmatpush.msra.mxu0 0.0
    %283 = vmatpush.msra.mxu0 0.0
    %284 = vmatpush.msra.mxu0 0.0
    %285 = vmatpush.msra.mxu0 %v264
    %286 = vmatpush.msra.mxu0 %v263
    %287 = vmatpush.msra.mxu0 %v262
    %288 = vmatpush.msra.mxu0 %v261
    %289 = vmatmul.f32.gmra.mxu0 %v271
    %v290 = vpop.f32.mrf.mxu0
    %v291 = vadd.f32 %v268, %v290
    %292 = vdwg.mxu0
    %v293 = vxor.u32 %v187, 2147483648
    %v294 = vmul.f32 %v293, 1.442695
    %v295 = vpow.pop %v294
    %v296 = vadd.f32 %v295, 1.0
    %v297 = vrcp.pop %v296
    %v298 = vmul.f32 %v296, %v297
    %v299 = vsub.f32 1.0, %v298
    %v300 = vmul.f32 %v297, %v299
    %v301 = vadd.f32 %v297, %v300
    %vm302 = vweird.f32 %v296
    %vm303 = vweird.f32 %v297
    %vm304 = vmor %vm302, %vm303
    %v305 = vsel %vm304, %v297, %v301
    %v306 = vand.u32 2147483647, %v296
    %vm307 = vcmp.eq.f32.partialorder %v306, 8.507059e+37
    %v308 = vand.u32 %v296, 2147483648
    %v309 = vor.u32 1.1754944e-38, %v308
    %v310 = vsel %vm307, %v309, %v305
    %v311 = vmul.f32 1.0, %v310
    %v312 = vtanh.pop %v187
    %v313 = vld [vmem:[%s3] sm:$0x3]
    %315 = vrot.lane.b32.xlu0 %v313, 32
    %v316 = vpop.permute.xlu0 %315
    %v318 = vmul.f32 %v311, %v316
    %320 = vrot.lane.b32.xlu0 %v312, 64
    %v321 = vpop.permute.xlu0 %320
    %v323 = vmul.f32 %v311, %v321
    %325 = vrot.lane.b32.xlu0 %v323, 32
    %v326 = vpop.permute.xlu0 %325
    %v328 = vadd.f32 %v318, %v326
    %v329 = vtanh.pop %v328
    %331 = vrot.lane.b32.xlu0 %v329, 64
    %v332 = vpop.permute.xlu0 %331
    %v334 = vmul.f32 %v311, %v332
    %336 = vrot.lane.b32.xlu0 %v334, 32
    %v337 = vpop.permute.xlu0 %336
    %vm339 = vcmask 254976
    %340 = vst.msk [vmem:[%s9] sm:$0x3] %vm339, %v337
    %342 = vrot.lane.b32.xlu0 %v328, 96
    %v343 = vpop.permute.xlu0 %342
    %345 = vst.msk [vmem:[%s10] sm:$0x3] %vm339, %v343
    %v346 = vld [vmem:[#allocation6] sm:$0xff]
    %v347 = vld [vmem:[#allocation6 + $0x8] sm:$0xff]
    %v348 = vld [vmem:[#allocation6 + $0x10] sm:$0xff]
    %v349 = vld [vmem:[#allocation6 + $0x18] sm:$0xff]
    %v350 = vsel %vm106, %v337, 0
    %352 = vmatpush.msra.mxu0 0.0
    %353 = vmatpush.msra.mxu0 0.0
    %354 = vmatpush.msra.mxu0 0.0
    %355 = vmatpush.msra.mxu0 0.0
    %356 = vmatpush.msra.mxu0 0.0
    %357 = vmatpush.msra.mxu0 0.0
    %358 = vmatpush.msra.mxu0 0.0
    %359 = vmatpush.msra.mxu0 0.0
    %360 = vmatpush.msra.mxu0 0.0
    %361 = vmatpush.msra.mxu0 0.0
    %362 = vmatpush.msra.mxu0 0.0
    %363 = vmatpush.msra.mxu0 0.0
    %364 = vmatpush.msra.mxu0 %v349
    %365 = vmatpush.msra.mxu0 %v348
    %366 = vmatpush.msra.mxu0 %v347
    %367 = vmatpush.msra.mxu0 %v346
    %368 = vmatmul.f32.gmra.mxu0 %v350
    %v369 = vpop.f32.mrf.mxu0
    %v370 = vadd.f32 0.0, %v369
    %371 = vdwg.mxu0
    %v372 = vadd.f32 %v221, %v370
    %v373 = vxor.u32 %v372, 2147483648
    %v374 = vmul.f32 %v373, 1.442695
    %v375 = vpow.pop %v374
    %v376 = vadd.f32 %v375, 1.0
    %v377 = vrcp.pop %v376
    %v378 = vmul.f32 %v376, %v377
    %v379 = vsub.f32 1.0, %v378
    %v380 = vmul.f32 %v377, %v379
    %v381 = vadd.f32 %v377, %v380
    %vm382 = vweird.f32 %v376
    %vm383 = vweird.f32 %v377
    %vm384 = vmor %vm382, %vm383
    %v385 = vsel %vm384, %v377, %v381
    %v386 = vand.u32 2147483647, %v376
    %vm387 = vcmp.eq.f32.partialorder %v386, 8.507059e+37
    %v388 = vand.u32 %v376, 2147483648
    %v389 = vor.u32 1.1754944e-38, %v388
    %v390 = vsel %vm387, %v389, %v385
    %v391 = vmul.f32 1.0, %v390
    %v392 = vtanh.pop %v372
    %s393 = scalar_lea.vmem %s3, 2
    %v394 = vld [vmem:[%s393] sm:$0x3]
    %396 = vrot.lane.b32.xlu0 %v394, 32
    %v397 = vpop.permute.xlu0 %396
    %v399 = vmul.f32 %v391, %v397
    %401 = vrot.lane.b32.xlu0 %v392, 64
    %v402 = vpop.permute.xlu0 %401
    %v404 = vmul.f32 %v391, %v402
    %406 = vrot.lane.b32.xlu0 %v404, 32
    %v407 = vpop.permute.xlu0 %406
    %v409 = vadd.f32 %v399, %v407
    %v410 = vtanh.pop %v409
    %412 = vrot.lane.b32.xlu0 %v410, 64
    %v413 = vpop.permute.xlu0 %412
    %v415 = vmul.f32 %v391, %v413
    %417 = vrot.lane.b32.xlu0 %v415, 32
    %v418 = vpop.permute.xlu0 %417
    %s420 = scalar_lea.vmem %s9, 2
    %421 = vst.msk [vmem:[%s420] sm:$0x3] %vm339, %v418
    %423 = vrot.lane.b32.xlu0 %v409, 96
    %v424 = vpop.permute.xlu0 %423
    %s426 = scalar_lea.vmem %s10, 2
    %427 = vst.msk [vmem:[%s426] sm:$0x3] %vm339, %v424
    %s428 = scalar_lea.vmem [#allocation6], 32
    %v429 = vld [vmem:[%s428] sm:$0xff]
    %v430 = vld [vmem:[%s428 + $0x8] sm:$0xff]
    %v431 = vld [vmem:[%s428 + $0x10] sm:$0xff]
    %v432 = vld [vmem:[%s428 + $0x18] sm:$0xff]
    %v433 = vsel %vm106, %v418, 0
    %435 = vmatpush.msra.mxu0 0.0
    %436 = vmatpush.msra.mxu0 0.0
    %437 = vmatpush.msra.mxu0 0.0
    %438 = vmatpush.msra.mxu0 0.0
    %439 = vmatpush.msra.mxu0 0.0
    %440 = vmatpush.msra.mxu0 0.0
    %441 = vmatpush.msra.mxu0 0.0
    %442 = vmatpush.msra.mxu0 0.0
    %443 = vmatpush.msra.mxu0 0.0
    %444 = vmatpush.msra.mxu0 0.0
    %445 = vmatpush.msra.mxu0 0.0
    %446 = vmatpush.msra.mxu0 0.0
    %447 = vmatpush.msra.mxu0 %v432
    %448 = vmatpush.msra.mxu0 %v431
    %449 = vmatpush.msra.mxu0 %v430
    %450 = vmatpush.msra.mxu0 %v429
    %451 = vmatmul.f32.gmra.mxu0 %v433
    %v452 = vpop.f32.mrf.mxu0
    %v453 = vadd.f32 0.0, %v452
    %454 = vdwg.mxu0
    %v455 = vadd.f32 %v256, %v453
    %v456 = vxor.u32 %v455, 2147483648
    %v457 = vmul.f32 %v456, 1.442695
    %v458 = vpow.pop %v457
    %v459 = vadd.f32 %v458, 1.0
    %v460 = vrcp.pop %v459
    %v461 = vmul.f32 %v459, %v460
    %v462 = vsub.f32 1.0, %v461
    %v463 = vmul.f32 %v460, %v462
    %v464 = vadd.f32 %v460, %v463
    %vm465 = vweird.f32 %v459
    %vm466 = vweird.f32 %v460
    %vm467 = vmor %vm465, %vm466
    %v468 = vsel %vm467, %v460, %v464
    %v469 = vand.u32 2147483647, %v459
    %vm470 = vcmp.eq.f32.partialorder %v469, 8.507059e+37
    %v471 = vand.u32 %v459, 2147483648
    %v472 = vor.u32 1.1754944e-38, %v471
    %v473 = vsel %vm470, %v472, %v468
    %v474 = vmul.f32 1.0, %v473
    %v475 = vtanh.pop %v455
    %s476 = scalar_lea.vmem %s3, 4
    %v477 = vld [vmem:[%s476] sm:$0x3]
    %479 = vrot.lane.b32.xlu0 %v477, 32
    %v480 = vpop.permute.xlu0 %479
    %v482 = vmul.f32 %v474, %v480
    %484 = vrot.lane.b32.xlu0 %v475, 64
    %v485 = vpop.permute.xlu0 %484
    %v487 = vmul.f32 %v474, %v485
    %489 = vrot.lane.b32.xlu0 %v487, 32
    %v490 = vpop.permute.xlu0 %489
    %v492 = vadd.f32 %v482, %v490
    %v493 = vtanh.pop %v492
    %495 = vrot.lane.b32.xlu0 %v493, 64
    %v496 = vpop.permute.xlu0 %495
    %v498 = vmul.f32 %v474, %v496
    %500 = vrot.lane.b32.xlu0 %v498, 32
    %v501 = vpop.permute.xlu0 %500
    %s503 = scalar_lea.vmem %s9, 4
    %504 = vst.msk [vmem:[%s503] sm:$0x3] %vm339, %v501
    %506 = vrot.lane.b32.xlu0 %v492, 96
    %v507 = vpop.permute.xlu0 %506
    %s509 = scalar_lea.vmem %s10, 4
    %510 = vst.msk [vmem:[%s509] sm:$0x3] %vm339, %v507
    %s511 = scalar_lea.vmem [#allocation6], 64
    %v512 = vld [vmem:[%s511] sm:$0xff]
    %v513 = vld [vmem:[%s511 + $0x8] sm:$0xff]
    %v514 = vld [vmem:[%s511 + $0x10] sm:$0xff]
    %v515 = vld [vmem:[%s511 + $0x18] sm:$0xff]
    %v516 = vsel %vm106, %v501, 0
    %518 = vmatpush.msra.mxu0 0.0
    %519 = vmatpush.msra.mxu0 0.0
    %520 = vmatpush.msra.mxu0 0.0
    %521 = vmatpush.msra.mxu0 0.0
    %522 = vmatpush.msra.mxu0 0.0
    %523 = vmatpush.msra.mxu0 0.0
    %524 = vmatpush.msra.mxu0 0.0
    %525 = vmatpush.msra.mxu0 0.0
    %526 = vmatpush.msra.mxu0 0.0
    %527 = vmatpush.msra.mxu0 0.0
    %528 = vmatpush.msra.mxu0 0.0
    %529 = vmatpush.msra.mxu0 0.0
    %530 = vmatpush.msra.mxu0 %v515
    %531 = vmatpush.msra.mxu0 %v514
    %532 = vmatpush.msra.mxu0 %v513
    %533 = vmatpush.msra.mxu0 %v512
    %534 = vmatmul.f32.gmra.mxu0 %v516
    %v535 = vpop.f32.mrf.mxu0
    %v536 = vadd.f32 0.0, %v535
    %537 = vdwg.mxu0
    %v538 = vadd.f32 %v291, %v536
    %v539 = vxor.u32 %v538, 2147483648
    %v540 = vmul.f32 %v539, 1.442695
    %v541 = vpow.pop %v540
    %v542 = vadd.f32 %v541, 1.0
    %v543 = vrcp.pop %v542
    %v544 = vmul.f32 %v542, %v543
    %v545 = vsub.f32 1.0, %v544
    %v546 = vmul.f32 %v543, %v545
    %v547 = vadd.f32 %v543, %v546
    %vm548 = vweird.f32 %v542
    %vm549 = vweird.f32 %v543
    %vm550 = vmor %vm548, %vm549
    %v551 = vsel %vm550, %v543, %v547
    %v552 = vand.u32 2147483647, %v542
    %vm553 = vcmp.eq.f32.partialorder %v552, 8.507059e+37
    %v554 = vand.u32 %v542, 2147483648
    %v555 = vor.u32 1.1754944e-38, %v554
    %v556 = vsel %vm553, %v555, %v551
    %v557 = vmul.f32 1.0, %v556
    %v558 = vtanh.pop %v538
    %s559 = scalar_lea.vmem %s3, 6
    %v560 = vld [vmem:[%s559] sm:$0x3]
    %562 = vrot.lane.b32.xlu0 %v560, 32
    %v563 = vpop.permute.xlu0 %562
    %v565 = vmul.f32 %v557, %v563
    %567 = vrot.lane.b32.xlu0 %v558, 64
    %v568 = vpop.permute.xlu0 %567
    %v570 = vmul.f32 %v557, %v568
    %572 = vrot.lane.b32.xlu0 %v570, 32
    %v573 = vpop.permute.xlu0 %572
    %v575 = vadd.f32 %v565, %v573
    %v576 = vtanh.pop %v575
    %578 = vrot.lane.b32.xlu0 %v576, 64
    %v579 = vpop.permute.xlu0 %578
    %v581 = vmul.f32 %v557, %v579
    %583 = vrot.lane.b32.xlu0 %v581, 32
    %v584 = vpop.permute.xlu0 %583
    %s586 = scalar_lea.vmem %s9, 6
    %587 = vst.msk [vmem:[%s586] sm:$0x3] %vm339, %v584
    %589 = vrot.lane.b32.xlu0 %v575, 96
    %v590 = vpop.permute.xlu0 %589
    %s592 = scalar_lea.vmem %s10, 6
    %593 = vst.msk [vmem:[%s592] sm:$0x3] %vm339, %v590
    // Predicated region
    $region54: #{decoder_forward.1} parent=1 // pred_check
      _
    $region55: #{decoder_forward.1} parent=1 // pred_check_branch
      %595 = sbr.rel (0) target = $region57
    $region56: #{decoder_forward.1} parent=1 // pred_region
      _
    $region57: #{decoder_forward.1} parent=1 // pred_fallthru
      _
    // Predicated region
    $region58: #{decoder_forward.1} parent=1 // pred_check
      _
    $region59: #{decoder_forward.1} parent=1 // pred_check_branch
      %597 = sbr.rel (0) target = $region61
    $region60: #{decoder_forward.1} parent=1 // pred_region
      _
    $region61: #{decoder_forward.1} parent=1 // pred_fallthru
      _
    // Predicated region
    $region62: #{decoder_forward.1} parent=1 // pred_check
      _
    $region63: #{decoder_forward.1} parent=1 // pred_check_branch
      %599 = sbr.rel (0) target = $region65
    $region64: #{decoder_forward.1} parent=1 // pred_region
      _
    $region65: #{decoder_forward.1} parent=1 // pred_fallthru
      _
    // Predicated region
    $region66: #{decoder_forward.1} parent=1 // pred_check
      _
    $region67: #{decoder_forward.1} parent=1 // pred_check_branch
      %601 = sbr.rel (0) target = $region69
    $region68: #{decoder_forward.1} parent=1 // pred_region
      _
    $region69: #{decoder_forward.1} parent=1 // pred_fallthru
      _
    %602 = vsyncpa [#allocation3], 1
    %603 = vsyncpa [#allocation5], 1
    %604 = vsyncpa [#allocation8], 1

</llo_original>
